<compile_context>
chip_gen: v5e
topology: v5e:2x2
jax: 0.10.0
libtpu: 0.0.40
codegen_flags: <defaults>
</compile_context>

<pallas_src>
import functools

import jax
import jax.numpy as jnp
import numpy as np
from jax import lax
from jax.experimental import pallas as pl
from jax.experimental.pallas import tpu as pltpu

TEMPERATURE = 0.07
BASE_TEMPERATURE = 0.07


# ---------------------------------------------------------------------------
# Kernel 1: fused per-condition projection  f_all = x @ W_all
#   grid = (M tiles ['parallel'], K chunks ['arbitrary'])
#   bf16 operands, f32 accumulator scratch, f32 output.
# ---------------------------------------------------------------------------
def _proj_kernel(x_ref, w_ref, f_ref, acc_ref):
    k = pl.program_id(1)

    @pl.when(k == 0)
    def _():
        acc_ref[...] = jnp.zeros_like(acc_ref)

    acc_ref[...] += jnp.dot(x_ref[...], w_ref[...],
                            preferred_element_type=jnp.float32)

    @pl.when(k == pl.num_programs(1) - 1)
    def _():
        f_ref[...] = acc_ref[...]


# ---------------------------------------------------------------------------
# Kernel 2: per-condition SupCon loss (contrast_mode='all') with flash-style
# column-chunked masked softmax.   grid = (n_cond ['parallel'],)
# ---------------------------------------------------------------------------
def _supcon_kernel(f_ref, lab_r_ref, lab_c_ref, loss_ref, *, tn):
    n = f_ref.shape[1]
    inv_t = jnp.float32(1.0 / TEMPERATURE)
    scale = jnp.float32(TEMPERATURE / BASE_TEMPERATURE)

    # L2-normalize in f32, cast to bf16 for the MXU Gram matmuls.
    # (no epsilon, matching the synthetic SupCon head / PyTorch original)
    f = f_ref[0]
    f = f * lax.rsqrt(jnp.sum(f * f, axis=1, keepdims=True))
    fb = f.astype(jnp.bfloat16)

    lab_r = lab_r_ref[0]          # (1, N) int32
    lab_c = lab_c_ref[0]          # (N, 1) int32

    # Rows are unit-norm, so diag(adc) == 1/T is the exact row max; the loss is
    # shift-invariant per row, so skip the explicit row-max (XLU) reduction and
    # use logits = adc - 1/T.  The diagonal is still excluded from Z exactly.
    z = jnp.zeros((n, 1), jnp.float32)
    pos_sum = jnp.zeros((n, 1), jnp.float32)
    pos_cnt = jnp.zeros((n, 1), jnp.float32)

    n_chunks = (n + tn - 1) // tn
    for j in range(n_chunks):                 # static unroll over column chunks
        lo = j * tn
        hi = min(n, lo + tn)
        width = hi - lo
        fj = fb[lo:hi, :]                     # (width, D) contrast chunk
        logits = lax.dot_general(
            fb, fj, (((1,), (1,)), ((), ())),
            preferred_element_type=jnp.float32) * inv_t - inv_t    # (N, width)

        row = lax.broadcasted_iota(jnp.int32, (n, width), 0)
        col = lax.broadcasted_iota(jnp.int32, (n, width), 1) + lo
        offd = row != col
        pos = jnp.logical_and(lab_c == lab_r[:, lo:hi], offd)

        # TODO(synk): if bundle dumps show the XLU slot saturating at large N,
        # turn these three lane reductions into matvecs against a ones column
        # (MXU is otherwise idle in this phase).
        z = z + jnp.sum(jnp.where(offd, jnp.exp(logits), 0.0),
                        axis=1, keepdims=True)
        pos_sum = pos_sum + jnp.sum(jnp.where(pos, logits, 0.0),
                                    axis=1, keepdims=True)
        pos_cnt = pos_cnt + jnp.sum(jnp.where(pos, 1.0, 0.0),
                                    axis=1, keepdims=True)

    # sum(pos*log_prob)/sum(pos) == sum(pos*logits)/sum(pos) - log(Z)
    mlpp = pos_sum / pos_cnt - jnp.log(z)
    loss = -scale * jnp.mean(mlpp)
    loss_ref[...] = jnp.full(loss_ref.shape, loss, loss_ref.dtype)


def _pick_tile(dim, candidates):
    for c in candidates:
        if c <= dim and dim % c == 0:
            return c
    return dim


@jax.jit
def cond_supcon_loss(images, labels, model_weights, cond_weights):
    """images: [2*bsz, C, H, W] f32; labels: [n_cond, bsz] i32;
    model_weights: [n_cond, C*H*W, D] f32; cond_weights: [n_cond] f32."""
    # TODO(synk): the PyTorch module wraps an arbitrary backbone `self.model`;
    # here it is synthesized as a per-condition linear head + L2 normalization.
    n_cond, bsz = labels.shape
    n = images.shape[0]                              # 2*bsz (view0 rows, then view1)
    x = images.reshape(n, -1).astype(jnp.bfloat16)
    chw = x.shape[1]
    d = model_weights.shape[-1]
    f_width = n_cond * d

    # Fused weight packing: (n_cond, CHW, D) -> (CHW, n_cond*D), bf16 operands.
    w_all = jnp.transpose(model_weights, (1, 0, 2)).reshape(chw, f_width)
    w_all = w_all.astype(jnp.bfloat16)

    tk = _pick_tile(chw, (512, 256, 128))
    tm = _pick_tile(n, (256, 128))
    n_m, n_k = n // tm, chw // tk

    vmem1 = 2 * (tm * tk * 2) + 2 * (tk * f_width * 2) + 3 * (tm * f_width * 4)
    f_all = pl.pallas_call(
        _proj_kernel,
        out_shape=jax.ShapeDtypeStruct((n, f_width), jnp.float32),
        grid=(n_m, n_k),
        in_specs=[
            pl.BlockSpec((tm, tk), lambda m, k: (m, k)),
            pl.BlockSpec((tk, f_width), lambda m, k: (k, 0)),
        ],
        out_specs=pl.BlockSpec((tm, f_width), lambda m, k: (m, 0)),
        scratch_shapes=[pltpu.VMEM((tm, f_width), jnp.float32)],
        compiler_params=pltpu.CompilerParams(
            dimension_semantics=("parallel", "arbitrary"),
            vmem_limit_bytes=int(min(56 * 2**20, max(8 * 2**20, 2 * vmem1)))),
    )(x, w_all)

    # (N, n_cond*D) -> (n_cond, N, D): each loss grid step gets a contiguous
    # per-condition feature block (tiny tensor; wrapper-side relayout).
    f_all = jnp.transpose(f_all.reshape(n, n_cond, d), (1, 0, 2))

    # Labels tiled over the two views; row + column orientations precomputed
    # so the kernel does int32 compares with no transpose / float cast.
    lab = jnp.concatenate([labels, labels], axis=1).astype(jnp.int32)  # (n_cond, N)
    lab_row = lab[:, None, :]                     # (n_cond, 1, N)
    lab_col = lab[:, :, None]                     # (n_cond, N, 1)

    tn = min(512, n)
    vmem2 = 2 * (n * d * 4) + n * d * 6 + 6 * n * tn * 4 + 8 * n * 4
    losses = pl.pallas_call(
        functools.partial(_supcon_kernel, tn=tn),
        out_shape=jax.ShapeDtypeStruct((n_cond, 1, 128), jnp.float32),
        grid=(n_cond,),
        in_specs=[
            pl.BlockSpec((1, n, d), lambda c: (c, 0, 0)),
            pl.BlockSpec((1, 1, n), lambda c: (c, 0, 0)),
            pl.BlockSpec((1, n, 1), lambda c: (c, 0, 0)),
        ],
        out_specs=pl.BlockSpec((1, 1, 128), lambda c: (c, 0, 0)),
        compiler_params=pltpu.CompilerParams(
            dimension_semantics=("parallel",),
            vmem_limit_bytes=int(min(56 * 2**20, max(8 * 2**20, 2 * vmem2)))),
    )(f_all, lab_row, lab_col)

    per_cond = losses[:, 0, 0]
    cw = cond_weights.astype(jnp.float32)
    return jnp.sum(per_cond * jnp.exp(-cw) + cw)


def reference_loss(images, labels, model_weights, cond_weights):
    """Pure-JAX reference mirroring the PyTorch forward (synthetic model =
    per-condition linear projection + L2 normalization).  Matmul inputs are
    cast to bf16 exactly as in the kernel (f32 accumulation / math)."""
    n_cond = labels.shape[0]
    x = images.reshape(images.shape[0], -1).astype(jnp.bfloat16)
    w = model_weights.astype(jnp.bfloat16)
    losses = []
    for i in range(n_cond):
        f = jnp.dot(x, w[i], preferred_element_type=jnp.float32)       # (2b, D)
        f = f * jax.lax.rsqrt(jnp.sum(f * f, axis=1, keepdims=True))
        fb = f.astype(jnp.bfloat16)
        lab = jnp.concatenate([labels[i], labels[i]])
        nn = f.shape[0]
        mask = (lab[:, None] == lab[None, :]).astype(jnp.float32)
        logits_mask = 1.0 - jnp.eye(nn, dtype=jnp.float32)
        mask = mask * logits_mask
        adc = jnp.dot(fb, fb.T, preferred_element_type=jnp.float32) / TEMPERATURE
        logits = adc - jnp.max(adc, axis=1, keepdims=True)
        exp_logits = jnp.exp(logits) * logits_mask
        log_prob = logits - jnp.log(jnp.sum(exp_logits, axis=1, keepdims=True))
        mlpp = jnp.sum(mask * log_prob, axis=1) / jnp.sum(mask, axis=1)
        losses.append(-(TEMPERATURE / BASE_TEMPERATURE) * jnp.mean(mlpp))
    losses = jnp.stack(losses)
    return jnp.sum(losses * jnp.exp(-cond_weights) + cond_weights)


if __name__ == "__main__":
    key = jax.random.PRNGKey(0)
    bsz, n_cond, C, H, W, D = 8, 3, 4, 16, 16, 32

    k_img, k_lab, k_mw = jax.random.split(key, 3)
    images = jax.random.normal(k_img, (2 * bsz, C, H, W), dtype=jnp.float32)
    labels = jax.random.randint(k_lab, (n_cond, bsz), 0, 4, dtype=jnp.int32)
    # deterministic synthetic "model": per-condition linear head; features are
    # L2-normalized as in standard SupCon usage.
    model_weights = 0.05 * jax.random.normal(k_mw, (n_cond, C * H * W, D),
                                             dtype=jnp.float32)
    # nn.Parameter(torch.ones(n_conditions)) init
    cond_weights = jnp.ones((n_cond,), dtype=jnp.float32)

    out = cond_supcon_loss(images, labels, model_weights, cond_weights)
    out = jax.block_until_ready(out)

    ref = reference_loss(images, labels, model_weights, cond_weights)
    np.testing.assert_allclose(np.asarray(out), np.asarray(ref),
                               rtol=5e-3, atol=5e-3)
    print("KERNEL_OK")
</pallas_src>

<mosaic_0001>
module attributes {stable_mosaic.version = 11 : i64} {
  func.func @_proj_kernel(%arg0: i32, %arg1: i32, %arg2: memref<16x512xbf16, #tpu.memory_space<vmem>>, %arg3: memref<512x96xbf16, #tpu.memory_space<vmem>>, %arg4: memref<16x96xf32, #tpu.memory_space<vmem>>, %arg5: memref<16x96xf32, #tpu.memory_space<vmem>>) attributes {dimension_semantics = [#tpu.dimension_semantics<parallel>, #tpu.dimension_semantics<arbitrary>], iteration_bounds = array<i64: 1, 2>, scalar_prefetch = 0 : i64, scratch_operands = 1 : i64, tpu.core_type = #tpu.core_type<tc>, window_params = [{transform_indices = @transform_0, window_bounds = array<i64: 16, 512>}, {transform_indices = @transform_1, window_bounds = array<i64: 512, 96>}, {transform_indices = @transform_2, window_bounds = array<i64: 16, 96>}]} {
    %c0_i32 = arith.constant 0 : i32
    %0 = arith.cmpi eq, %arg1, %c0_i32 : i32
    %1 = arith.extui %0 : i1 to i32
    %c0_i32_0 = arith.constant 0 : i32
    %2 = arith.cmpi ne, %1, %c0_i32_0 : i32
    scf.if %2 {
      %cst_9 = arith.constant 0.000000e+00 : f32
      %12 = vector.broadcast %cst_9 : f32 to vector<16x96xf32>
      %c0_10 = arith.constant 0 : index
      %c0_11 = arith.constant 0 : index
      %13 = vector.load %arg5[%c0_10, %c0_11] : memref<16x96xf32, #tpu.memory_space<vmem>>, vector<16x96xf32>
      tpu.vector_store %arg5[%c0_10, %c0_11], %12 {strides = array<i32>} : memref<16x96xf32, #tpu.memory_space<vmem>>, vector<16x96xf32>,
    } else {
    }
    %c0 = arith.constant 0 : index
    %c0_1 = arith.constant 0 : index
    %3 = vector.load %arg5[%c0, %c0_1] : memref<16x96xf32, #tpu.memory_space<vmem>>, vector<16x96xf32>
    %c0_2 = arith.constant 0 : index
    %c0_3 = arith.constant 0 : index
    %4 = vector.load %arg2[%c0_2, %c0_3] : memref<16x512xbf16, #tpu.memory_space<vmem>>, vector<16x512xbf16>
    %c0_4 = arith.constant 0 : index
    %c0_5 = arith.constant 0 : index
    %5 = vector.load %arg3[%c0_4, %c0_5] : memref<512x96xbf16, #tpu.memory_space<vmem>>, vector<512x96xbf16>
    %cst = arith.constant dense<0.000000e+00> : vector<16x96xf32>
    %6 = tpu.matmul %4, %5, %cst {dimension_numbers = #tpu.dot_dimension_numbers<[1], [0], [0], [1], [0, 0, 1, 1], [], []>} : vector<16x512xbf16>, vector<512x96xbf16>, vector<16x96xf32> -> vector<16x96xf32>
    %7 = arith.addf %3, %6 : vector<16x96xf32>
    %c0_6 = arith.constant 0 : index
    %c0_7 = arith.constant 0 : index
    %8 = vector.load %arg5[%c0_6, %c0_7] : memref<16x96xf32, #tpu.memory_space<vmem>>, vector<16x96xf32>
    tpu.vector_store %arg5[%c0_6, %c0_7], %7 {strides = array<i32>} : memref<16x96xf32, #tpu.memory_space<vmem>>, vector<16x96xf32>,
    %c1_i32 = arith.constant 1 : i32
    %9 = arith.cmpi eq, %arg1, %c1_i32 : i32
    %10 = arith.extui %9 : i1 to i32
    %c0_i32_8 = arith.constant 0 : i32
    %11 = arith.cmpi ne, %10, %c0_i32_8 : i32
    scf.if %11 {
      %c0_9 = arith.constant 0 : index
      %c0_10 = arith.constant 0 : index
      %12 = vector.load %arg5[%c0_9, %c0_10] : memref<16x96xf32, #tpu.memory_space<vmem>>, vector<16x96xf32>
      %c0_11 = arith.constant 0 : index
      %c0_12 = arith.constant 0 : index
      %13 = vector.load %arg4[%c0_11, %c0_12] : memref<16x96xf32, #tpu.memory_space<vmem>>, vector<16x96xf32>
      tpu.vector_store %arg4[%c0_11, %c0_12], %12 {strides = array<i32>} : memref<16x96xf32, #tpu.memory_space<vmem>>, vector<16x96xf32>,
    } else {
    }
    return
  }
  func.func @transform_0(%arg0: i32, %arg1: i32) -> (i32, i32) {
    %c0_i32 = arith.constant 0 : i32
    return %arg0, %arg1 : i32, i32
  }
  func.func @transform_1(%arg0: i32, %arg1: i32) -> (i32, i32) {
    %c0_i32 = arith.constant 0 : i32
    %c0_i32_0 = arith.constant 0 : i32
    return %arg1, %c0_i32 : i32, i32
  }
  func.func @transform_2(%arg0: i32, %arg1: i32) -> (i32, i32) {
    %c0_i32 = arith.constant 0 : i32
    %c0_i32_0 = arith.constant 0 : i32
    return %arg0, %c0_i32 : i32, i32
  }
}

module attributes {stable_mosaic.version = 11 : i64} {
  func.func @_supcon_kernel(%arg0: i32, %arg1: memref<1x16x32xf32, #tpu.memory_space<vmem>>, %arg2: memref<1x1x16xi32, #tpu.memory_space<vmem>>, %arg3: memref<1x16x1xi32, #tpu.memory_space<vmem>>, %arg4: memref<1x1x128xf32, #tpu.memory_space<vmem>>) attributes {dimension_semantics = [#tpu.dimension_semantics<parallel>], iteration_bounds = array<i64: 3>, scalar_prefetch = 0 : i64, scratch_operands = 0 : i64, tpu.core_type = #tpu.core_type<tc>, window_params = [{transform_indices = @transform_0, window_bounds = array<i64: 1, 16, 32>}, {transform_indices = @transform_1, window_bounds = array<i64: 1, 1, 16>}, {transform_indices = @transform_2, window_bounds = array<i64: 1, 16, 1>}, {transform_indices = @transform_3, window_bounds = array<i64: 1, 1, 128>}]} {
    %c0 = arith.constant 0 : index
    %c0_0 = arith.constant 0 : index
    %c0_1 = arith.constant 0 : index
    %0 = vector.load %arg1[%c0, %c0_0, %c0_1] : memref<1x16x32xf32, #tpu.memory_space<vmem>>, vector<1x16x32xf32>
    %1 = vector.shape_cast %0 : vector<1x16x32xf32> to vector<16x32xf32>
    %2 = arith.mulf %1, %1 : vector<16x32xf32>
    %cst = arith.constant dense<0.000000e+00> : vector<16xf32>
    %3 = vector.multi_reduction <add>, %2, %cst [1] : vector<16x32xf32> to vector<16xf32>
    %4 = vector.shape_cast %3 : vector<16xf32> to vector<16x1xf32>
    %5 = math.rsqrt %4 : vector<16x1xf32>
    %6 = vector.broadcast %5 : vector<16x1xf32> to vector<16x32xf32>
    %7 = arith.mulf %1, %6 : vector<16x32xf32>
    %8 = arith.truncf %7 : vector<16x32xf32> to vector<16x32xbf16>
    %c0_2 = arith.constant 0 : index
    %c0_3 = arith.constant 0 : index
    %c0_4 = arith.constant 0 : index
    %9 = vector.load %arg2[%c0_2, %c0_3, %c0_4] : memref<1x1x16xi32, #tpu.memory_space<vmem>>, vector<1x1x16xi32>
    %10 = vector.shape_cast %9 : vector<1x1x16xi32> to vector<1x16xi32>
    %c0_5 = arith.constant 0 : index
    %c0_6 = arith.constant 0 : index
    %c0_7 = arith.constant 0 : index
    %11 = vector.load %arg3[%c0_5, %c0_6, %c0_7] : memref<1x16x1xi32, #tpu.memory_space<vmem>>, vector<1x16x1xi32>
    %12 = vector.shape_cast %11 : vector<1x16x1xi32> to vector<16x1xi32>
    %cst_8 = arith.constant 0.000000e+00 : f32
    %13 = vector.broadcast %cst_8 : f32 to vector<16x1xf32>
    %cst_9 = arith.constant 0.000000e+00 : f32
    %14 = vector.broadcast %cst_9 : f32 to vector<16x1xf32>
    %cst_10 = arith.constant 0.000000e+00 : f32
    %15 = vector.broadcast %cst_10 : f32 to vector<16x1xf32>
    %cst_11 = arith.constant dense<0.000000e+00> : vector<16x16xf32>
    %16 = tpu.matmul %8, %8, %cst_11 {dimension_numbers = #tpu.dot_dimension_numbers<[1], [1], [0], [0], [0, 0, 1, 0], [], []>} : vector<16x32xbf16>, vector<16x32xbf16>, vector<16x16xf32> -> vector<16x16xf32>
    %cst_12 = arith.constant 14.2857141 : f32
    %17 = vector.broadcast %cst_12 : f32 to vector<16x16xf32>
    %18 = arith.mulf %16, %17 : vector<16x16xf32>
    %cst_13 = arith.constant 14.2857141 : f32
    %19 = vector.broadcast %cst_13 : f32 to vector<16x16xf32>
    %20 = arith.subf %18, %19 : vector<16x16xf32>
    %21 = tpu.iota {dimensions = array<i32: 0>} : vector<16x16xi32>
    %22 = tpu.iota {dimensions = array<i32: 1>} : vector<16x16xi32>
    %c0_i32 = arith.constant 0 : i32
    %23 = vector.broadcast %c0_i32 : i32 to vector<16x16xi32>
    %24 = arith.addi %22, %23 : vector<16x16xi32>
    %25 = arith.cmpi ne, %21, %24 : vector<16x16xi32>
    %26 = vector.broadcast %12 : vector<16x1xi32> to vector<16x16xi32>
    %27 = vector.broadcast %10 : vector<1x16xi32> to vector<16x16xi32>
    %28 = arith.cmpi eq, %26, %27 : vector<16x16xi32>
    %29 = arith.andi %28, %25 : vector<16x16xi1>
    %30 = math.exp %20 : vector<16x16xf32>
    %cst_14 = arith.constant 0.000000e+00 : f32
    %31 = vector.broadcast %cst_14 : f32 to vector<16x16xf32>
    %32 = arith.select %25, %30, %31 : vector<16x16xi1>, vector<16x16xf32>
    %cst_15 = arith.constant dense<0.000000e+00> : vector<16xf32>
    %33 = vector.multi_reduction <add>, %32, %cst_15 [1] : vector<16x16xf32> to vector<16xf32>
    %34 = vector.shape_cast %33 : vector<16xf32> to vector<16x1xf32>
    %35 = arith.addf %13, %34 : vector<16x1xf32>
    %cst_16 = arith.constant 0.000000e+00 : f32
    %36 = vector.broadcast %cst_16 : f32 to vector<16x16xf32>
    %37 = arith.select %29, %20, %36 : vector<16x16xi1>, vector<16x16xf32>
    %cst_17 = arith.constant dense<0.000000e+00> : vector<16xf32>
    %38 = vector.multi_reduction <add>, %37, %cst_17 [1] : vector<16x16xf32> to vector<16xf32>
    %39 = vector.shape_cast %38 : vector<16xf32> to vector<16x1xf32>
    %40 = arith.addf %14, %39 : vector<16x1xf32>
    %cst_18 = arith.constant 1.000000e+00 : f32
    %cst_19 = arith.constant 0.000000e+00 : f32
    %41 = vector.broadcast %cst_18 : f32 to vector<16x16xf32>
    %42 = vector.broadcast %cst_19 : f32 to vector<16x16xf32>
    %43 = arith.select %29, %41, %42 : vector<16x16xi1>, vector<16x16xf32>
    %cst_20 = arith.constant dense<0.000000e+00> : vector<16xf32>
    %44 = vector.multi_reduction <add>, %43, %cst_20 [1] : vector<16x16xf32> to vector<16xf32>
    %45 = vector.shape_cast %44 : vector<16xf32> to vector<16x1xf32>
    %46 = arith.addf %15, %45 : vector<16x1xf32>
    %47 = arith.divf %40, %46 : vector<16x1xf32>
    %48 = math.log %35 : vector<16x1xf32>
    %49 = arith.subf %47, %48 : vector<16x1xf32>
    %cst_21 = arith.constant 0.000000e+00 : f32
    %cst_22 = arith.constant 1.000000e+00 : f32
    %50 = arith.subf %cst_21, %cst_22 : f32
    %51 = vector.shape_cast %49 : vector<16x1xf32> to vector<1x16x1xf32>
    %cst_23 = arith.constant dense<0.000000e+00> : vector<1xf32>
    %52 = vector.multi_reduction <add>, %51, %cst_23 [1, 2] : vector<1x16x1xf32> to vector<1xf32>
    %53 = vector.shape_cast %52 : vector<1xf32> to vector<1x1x1xf32>
    %54 = vector.extract %53[0, 0, 0] : f32 from vector<1x1x1xf32>
    %cst_24 = arith.constant 1.600000e+01 : f32
    %55 = arith.divf %54, %cst_24 : f32
    %56 = arith.mulf %50, %55 : f32
    %57 = vector.broadcast %56 : f32 to vector<1x1x128xf32>
    %c0_25 = arith.constant 0 : index
    %c0_26 = arith.constant 0 : index
    %c0_27 = arith.constant 0 : index
    %58 = vector.load %arg4[%c0_25, %c0_26, %c0_27] : memref<1x1x128xf32, #tpu.memory_space<vmem>>, vector<1x1x128xf32>
    tpu.vector_store %arg4[%c0_25, %c0_26, %c0_27], %57 {strides = array<i32>} : memref<1x1x128xf32, #tpu.memory_space<vmem>>, vector<1x1x128xf32>,
    return
  }
  func.func @transform_0(%arg0: i32) -> (i32, i32, i32) {
    %c0_i32 = arith.constant 0 : i32
    %c0_i32_0 = arith.constant 0 : i32
    %c0_i32_1 = arith.constant 0 : i32
    return %arg0, %c0_i32, %c0_i32_0 : i32, i32, i32
  }
  func.func @transform_1(%arg0: i32) -> (i32, i32, i32) {
    %c0_i32 = arith.constant 0 : i32
    %c0_i32_0 = arith.constant 0 : i32
    %c0_i32_1 = arith.constant 0 : i32
    return %arg0, %c0_i32, %c0_i32_0 : i32, i32, i32
  }
  func.func @transform_2(%arg0: i32) -> (i32, i32, i32) {
    %c0_i32 = arith.constant 0 : i32
    %c0_i32_0 = arith.constant 0 : i32
    %c0_i32_1 = arith.constant 0 : i32
    return %arg0, %c0_i32, %c0_i32_0 : i32, i32, i32
  }
  func.func @transform_3(%arg0: i32) -> (i32, i32, i32) {
    %c0_i32 = arith.constant 0 : i32
    %c0_i32_0 = arith.constant 0 : i32
    %c0_i32_1 = arith.constant 0 : i32
    return %arg0, %c0_i32, %c0_i32_0 : i32, i32, i32
  }
}

</mosaic_0001>

<llo_original>
// kernel: cond_supcon_loss.3
$region0: #{cond_supcon_loss.3}
  #allocation0 [shape = 'u32[]', space=smem, size = 0x4, offset = 0x4, fixed_abs, tag = 'smem constant byte address 0x4 - core index']
  #allocation1 [shape = 'u32[72,128]{1,0:T(1,128)}', space=vmem, size = 0x9000, scoped, tag = 'internal scratch']
  %s0 = inlined_call_operand.vmem [shape: f32[3,16,32], index: 0, kind: input, shape index: {}]
  %s1 = inlined_call_operand.vmem [shape: s32[3,1,16], index: 1, kind: input, shape index: {}]
  %s2 = inlined_call_operand.vmem [shape: s32[3,16,1], index: 2, kind: input, shape index: {}]
  %s3 = inlined_call_operand.vmem [shape: f32[3,1,128], index: 3, kind: output, shape index: {}]
  %s4 = sld [smem:[#allocation0]]
  $region45: #{cond_supcon_loss.3} parent=0
    _
  %s6 = ssub.s32 1, %s4
  %s7 = scalar_select 0, %s6, %s4
  loop: start=0, step=1, limit=5
  $region2: #{cond_supcon_loss.3} parent=0 // loop_pre_header
    _
  $region3: #{cond_supcon_loss.3} parent=0 // loop_header
    %s9 = sphi 0, %s13
    %p10 = scmp.ge.s32.totalorder %s9, 5
    %s19 = sphi 0, %s21
    %s22 = sphi 0, %s19
    %s23 = sphi 0, %s22
    %s39 = sphi 0, %s23
    %s45 = sphi 0, %s47
    %s48 = sphi 0, %s45
    %s49 = sphi 0, %s48
    %s65 = sphi 0, %s49
    %s71 = sphi 0, %s73
    %s74 = sphi 0, %s71
    %s75 = sphi 0, %s74
    %s91 = sphi 0, %s75
    %s97 = sphi 0, %s99
    %s100 = sphi 0, %s97
    %s101 = sphi 0, %s100
    %s117 = sphi 0, %s101
  $region4: #{cond_supcon_loss.3} parent=0 // loop_header_branch
    %12 = sbr.rel (%p10) target = $region8
  $region5: #{cond_supcon_loss.3} parent=0 // loop_body
    %s14 = ssub.s32 %s9, 1
    %s15 = ssub.s32 %s9, 2
    %s16 = sadd.s32 %s9, 1
    %s17 = ssub.s32 %s9, %s16
    %p18 = scmp.eq.s32.totalorder %s17, 0
    %s20 = sadd.s32 %s19, 1
    %s21 = scalar_select %p18, %s19, %s20
    %p24 = pneg %p18
    %p25 = scmp.eq.s32.totalorder %s9, 2
    %p26 = por %p24, %p25
    %p27 = scmp.ne.s32.totalorder %s19, %s22
    %p28 = scmp.eq.s32.totalorder %s9, 0
    %p29 = por %p27, %p28
    %p30 = scmp.ne.s32.totalorder %s19, %s22
    %p31 = scmp.eq.s32.totalorder %s14, 2
    %p32 = por %p30, %p31
    %p33 = scmp.ne.s32.totalorder %s22, %s23
    %p34 = scmp.eq.s32.totalorder %s14, 0
    %p35 = por %p33, %p34
    %p36 = scmp.ne.s32.totalorder %s22, %s23
    %p37 = scmp.eq.s32.totalorder %s15, 2
    %p38 = por %p36, %p37
    %p40 = scmp.ne.s32.totalorder %s23, %s39
    %p41 = scmp.eq.s32.totalorder %s15, 0
    %p42 = por %p40, %p41
    %s43 = ssub.s32 %s9, %s16
    %p44 = scmp.eq.s32.totalorder %s43, 0
    %s46 = sadd.s32 %s45, 1
    %s47 = scalar_select %p44, %s45, %s46
    %p50 = pneg %p44
    %p51 = scmp.eq.s32.totalorder %s9, 2
    %p52 = por %p50, %p51
    %p53 = scmp.ne.s32.totalorder %s45, %s48
    %p54 = scmp.eq.s32.totalorder %s9, 0
    %p55 = por %p53, %p54
    %p56 = scmp.ne.s32.totalorder %s45, %s48
    %p57 = scmp.eq.s32.totalorder %s14, 2
    %p58 = por %p56, %p57
    %p59 = scmp.ne.s32.totalorder %s48, %s49
    %p60 = scmp.eq.s32.totalorder %s14, 0
    %p61 = por %p59, %p60
    %p62 = scmp.ne.s32.totalorder %s48, %s49
    %p63 = scmp.eq.s32.totalorder %s15, 2
    %p64 = por %p62, %p63
    %p66 = scmp.ne.s32.totalorder %s49, %s65
    %p67 = scmp.eq.s32.totalorder %s15, 0
    %p68 = por %p66, %p67
    %s69 = ssub.s32 %s9, %s16
    %p70 = scmp.eq.s32.totalorder %s69, 0
    %s72 = sadd.s32 %s71, 1
    %s73 = scalar_select %p70, %s71, %s72
    %p76 = pneg %p70
    %p77 = scmp.eq.s32.totalorder %s9, 2
    %p78 = por %p76, %p77
    %p79 = scmp.ne.s32.totalorder %s71, %s74
    %p80 = scmp.eq.s32.totalorder %s9, 0
    %p81 = por %p79, %p80
    %p82 = scmp.ne.s32.totalorder %s71, %s74
    %p83 = scmp.eq.s32.totalorder %s14, 2
    %p84 = por %p82, %p83
    %p85 = scmp.ne.s32.totalorder %s74, %s75
    %p86 = scmp.eq.s32.totalorder %s14, 0
    %p87 = por %p85, %p86
    %p88 = scmp.ne.s32.totalorder %s74, %s75
    %p89 = scmp.eq.s32.totalorder %s15, 2
    %p90 = por %p88, %p89
    %p92 = scmp.ne.s32.totalorder %s75, %s91
    %p93 = scmp.eq.s32.totalorder %s15, 0
    %p94 = por %p92, %p93
    %s95 = ssub.s32 %s9, %s16
    %p96 = scmp.eq.s32.totalorder %s95, 0
    %s98 = sadd.s32 %s97, 1
    %s99 = scalar_select %p96, %s97, %s98
    %p102 = pneg %p96
    %p103 = scmp.eq.s32.totalorder %s9, 2
    %p104 = por %p102, %p103
    %p105 = scmp.ne.s32.totalorder %s97, %s100
    %p106 = scmp.eq.s32.totalorder %s9, 0
    %p107 = por %p105, %p106
    %p108 = scmp.ne.s32.totalorder %s97, %s100
    %p109 = scmp.eq.s32.totalorder %s14, 2
    %p110 = por %p108, %p109
    %p111 = scmp.ne.s32.totalorder %s100, %s101
    %p112 = scmp.eq.s32.totalorder %s14, 0
    %p113 = por %p111, %p112
    %p114 = scmp.ne.s32.totalorder %s100, %s101
    %p115 = scmp.eq.s32.totalorder %s15, 2
    %p116 = por %p114, %p115
    %p118 = scmp.ne.s32.totalorder %s101, %s117
    %p119 = scmp.eq.s32.totalorder %s15, 0
    %p120 = por %p118, %p119
    %p121 = scmp.le.s32.totalorder 1, %s9
    %p122 = scmp.lt.s32.totalorder %s9, 4
    %p123 = pnand %p121, %p122
    %p124 = pneg %p123
    // Predicated region
    $region9: #{cond_supcon_loss.3} parent=5 // pred_check
      _
    $region10: #{cond_supcon_loss.3} parent=5 // pred_check_branch
      %126 = sbr.rel (%p123) target = $region12
    $region11: #{cond_supcon_loss.3} parent=5 // pred_region
      %s127 = ssub.s32 %s9, 1
    $region12: #{cond_supcon_loss.3} parent=5 // pred_fallthru
      _
    %p128 = scmp.lt.s32.totalorder %s9, 3
    // Predicated region
    $region13: #{cond_supcon_loss.3} parent=5 // pred_check
      %p129 = pneg %p128
    $region14: #{cond_supcon_loss.3} parent=5 // pred_check_branch
      %131 = sbr.rel (%p129) target = $region16
    $region15: #{cond_supcon_loss.3} parent=5 // pred_region
      // Predicated region
      $region17: #{cond_supcon_loss.3} parent=15 // pred_check
        %p132 = pneg %p29
      $region18: #{cond_supcon_loss.3} parent=15 // pred_check_branch
        %134 = sbr.rel (%p132) target = $region20
      $region19: #{cond_supcon_loss.3} parent=15 // pred_region
        %p135 = scmp.lt.s32.totalorder %s9, 2
        %s136 = scalar_select %p135, %s9, 2
        %s137 = smul.addr %s136, 2
        %s138 = smul.addr %s137, 8
        %s139 = scalar_lea.vmem %s0, %s138
      $region20: #{cond_supcon_loss.3} parent=15 // pred_fallthru
        _
      // Predicated region
      $region21: #{cond_supcon_loss.3} parent=15 // pred_check
        %p140 = pneg %p55
      $region22: #{cond_supcon_loss.3} parent=15 // pred_check_branch
        %142 = sbr.rel (%p140) target = $region24
      $region23: #{cond_supcon_loss.3} parent=15 // pred_region
        %p143 = scmp.lt.s32.totalorder %s9, 2
        %s144 = scalar_select %p143, %s9, 2
        %s145 = scalar_lea.vmem %s1, %s144
      $region24: #{cond_supcon_loss.3} parent=15 // pred_fallthru
        _
      // Predicated region
      $region25: #{cond_supcon_loss.3} parent=15 // pred_check
        %p146 = pneg %p81
      $region26: #{cond_supcon_loss.3} parent=15 // pred_check_branch
        %148 = sbr.rel (%p146) target = $region28
      $region27: #{cond_supcon_loss.3} parent=15 // pred_region
        %p149 = scmp.lt.s32.totalorder %s9, 2
        %s150 = scalar_select %p149, %s9, 2
        %s151 = smul.addr %s150, 2
        %s152 = smul.addr %s151, 8
        %s153 = scalar_lea.vmem %s2, %s152
      $region28: #{cond_supcon_loss.3} parent=15 // pred_fallthru
        _
    $region16: #{cond_supcon_loss.3} parent=5 // pred_fallthru
      _
    %p154 = scmp.le.s32.totalorder 1, %s9
    %p155 = scmp.lt.s32.totalorder %s9, 4
    %p156 = pnand %p154, %p155
    %p157 = pneg %p156
    // Predicated region
    $region29: #{cond_supcon_loss.3} parent=5 // pred_check
      _
    $region30: #{cond_supcon_loss.3} parent=5 // pred_check_branch
      %159 = sbr.rel (%p156) target = $region32
    $region31: #{cond_supcon_loss.3} parent=5 // pred_region
      %s160 = ssub.s32 %s9, 1
      %p161 = scmp.lt.s32.totalorder %s14, 2
      %s162 = scalar_select %p161, %s14, 2
      %s163 = smul.addr %s162, 2
      %s164 = smul.addr %s163, 8
      %s165 = scalar_lea.vmem %s0, %s164
      %p166 = pneg %p35
      %p167 = pneg %p32
      %p168 = scmp.lt.s32.totalorder %s14, 2
      %s169 = scalar_select %p168, %s14, 2
      %s170 = scalar_lea.vmem %s1, %s169
      %p171 = pneg %p61
      %p172 = pneg %p58
      %p173 = scmp.lt.s32.totalorder %s14, 2
      %s174 = scalar_select %p173, %s14, 2
      %s175 = smul.addr %s174, 2
      %s176 = smul.addr %s175, 8
      %s177 = scalar_lea.vmem %s2, %s176
      %p178 = pneg %p87
      %p179 = pneg %p84
      %p180 = pneg %p113
      %p181 = pneg %p110
      %p182 = scmp.lt.s32.totalorder %s14, 2
      %s183 = scalar_select %p182, %s14, 2
      %s184 = scalar_lea.vmem %s3, %s183
      %p185 = scmp.lt.s32.totalorder %s14, 2
      %s186 = scalar_select %p185, %s14, 2
      %s187 = smul.addr %s186, 2
      %s188 = smul.addr %s187, 8
      %s189 = scalar_lea.vmem %s0, %s188
      %p190 = scmp.lt.s32.totalorder %s14, 2
      %s191 = scalar_select %p190, %s14, 2
      %s192 = scalar_lea.vmem %s1, %s191
      %p193 = scmp.lt.s32.totalorder %s14, 2
      %s194 = scalar_select %p193, %s14, 2
      %s195 = smul.addr %s194, 2
      %s196 = smul.addr %s195, 8
      %s197 = scalar_lea.vmem %s2, %s196
      %p198 = scmp.lt.s32.totalorder %s14, 2
      %s199 = scalar_select %p198, %s14, 2
      %s200 = scalar_lea.vmem %s3, %s199
      %v202 = vld [vmem:[%s189] sm:$0xff]
      %v203 = vld [vmem:[%s189 + $0x8] sm:$0xff]
      %v204 = vmul.f32 %v202, %v202
      %v205 = vmul.f32 %v203, %v203
      %vm206 = vcmask 261120
      %v207 = vsel %vm206, %v204, 0.0
      %208 = vadd.xlane.f32.xlu0 %v207
      %v209 = vpop.xlane.xlu0 %208
      %v210 = vsel %vm206, %v205, 0.0
      %211 = vadd.xlane.f32.xlu0 %v210
      %v212 = vpop.xlane.xlu0 %211
      %v213 = vrsqrt.pop %v209
      %v214 = vmul.f32 %v213, %v209
      %v215 = vmul.f32 %v214, %v213
      %v216 = vmul.f32 0.5, %v215
      %v217 = vsub.f32 1.5, %v216
      %v218 = vmul.f32 %v213, %v217
      %vm219 = vweird.f32 %v209
      %vm220 = vweird.f32 %v213
      %vm221 = vmor %vm219, %vm220
      %v222 = vsel %vm221, %v213, %v218
      %v223 = vrsqrt.pop %v212
      %v224 = vmul.f32 %v223, %v212
      %v225 = vmul.f32 %v224, %v223
      %v226 = vmul.f32 0.5, %v225
      %v227 = vsub.f32 1.5, %v226
      %v228 = vmul.f32 %v223, %v227
      %vm229 = vweird.f32 %v212
      %vm230 = vweird.f32 %v223
      %vm231 = vmor %vm229, %vm230
      %v232 = vsel %vm231, %v223, %v228
      %v233 = vmul.f32 %v202, %v222
      %v234 = vmul.f32 %v203, %v232
      %v235 = vpack.c.bf16 %v234, %v233
      %v236 = vld [vmem:[%s192] sm:$0x1]
      %v237 = vld [vmem:[%s197] sm:$0xff]
      %v238 = vld [vmem:[%s197 + $0x8] sm:$0xff]
      %v240 = vsel %vm206, %v235, 0
      %242 = vmatpush.bf16.xpose.msra.mxu0 0
      %243 = vmatpush.bf16.xpose.msra.mxu0 0
      %244 = vmatpush.bf16.xpose.msra.mxu0 0
      %245 = vmatpush.bf16.xpose.msra.mxu0 0
      %246 = vmatpush.bf16.xpose.msra.mxu0 0
      %247 = vmatpush.bf16.xpose.msra.mxu0 0
      %248 = vmatpush.bf16.xpose.msra.mxu0 0
      %249 = vmatpush.bf16.xpose.msra.mxu0 %v240
      %250 = vmatmul.bf16.gmra.mxu0 %v240
      %v251 = vpop.f32.mrf.mxu0
      %v252 = vadd.f32 0.0, %v251
      %v253 = vpop.f32.mrf.mxu0
      %v254 = vadd.f32 0.0, %v253
      %255 = vdwg.mxu0
      %v256 = vmul.f32 %v252, 14.285714
      %v257 = vmul.f32 %v254, 14.285714
      %v258 = vsub.f32 %v256, 14.285714
      %v259 = vsub.f32 %v257, 14.285714
      %v260 = vlaneseq
      %v261 = vshrl.u32 %v260, 7
      %v262 = vadd.s32 %v261, 8
      %v263 = vlaneseq
      %v264 = vand.u32 %v263, 127
      %vm265 = vcmp.ne.s32.totalorder %v261, %v264
      %vm266 = vcmp.ne.s32.totalorder %v262, %v264
      %267 = vset.pattern.permute.xlu0 0
      %268 = vperm.xlu0 %267, %v237
      %v269 = vpop.permute.xlu0 %268
      %270 = vset.pattern.permute.xlu0 0
      %271 = vperm.xlu0 %270, %v238
      %v272 = vpop.permute.xlu0 %271
      %v273 = vperm.slane %v236, 0
      %vm274 = vcmp.eq.s32.totalorder %v269, %v273
      %vm275 = vcmp.eq.s32.totalorder %v272, %v273
      %vm276 = vmand %vm274, %vm265
      %vm277 = vmand %vm275, %vm266
      %v278 = vmul.f32 %v258, 1.442695
      %v279 = vpow.pop %v278
      %v280 = vmul.f32 %v259, 1.442695
      %v281 = vpow.pop %v280
      %v282 = vsel %vm265, %v279, 0.0
      %v283 = vsel %vm266, %v281, 0.0
      %vm284 = vcmask 130048
      %v285 = vsel %vm284, %v282, 0.0
      %286 = vadd.xlane.f32.xlu0 %v285
      %v287 = vpop.xlane.xlu0 %286
      %v288 = vsel %vm284, %v283, 0.0
      %289 = vadd.xlane.f32.xlu0 %v288
      %v290 = vpop.xlane.xlu0 %289
      %v291 = vadd.f32 %v287, 0.0
      %v292 = vadd.f32 %v290, 0.0
      %v293 = vsel %vm276, %v258, 0.0
      %v294 = vsel %vm277, %v259, 0.0
      %v295 = vsel %vm284, %v293, 0.0
      %296 = vadd.xlane.f32.xlu0 %v295
      %v297 = vpop.xlane.xlu0 %296
      %v298 = vsel %vm284, %v294, 0.0
      %299 = vadd.xlane.f32.xlu0 %v298
      %v300 = vpop.xlane.xlu0 %299
      %v301 = vadd.f32 %v297, 0.0
      %v302 = vadd.f32 %v300, 0.0
      %v303 = vsel %vm276, 1.0, 0.0
      %v304 = vsel %vm277, 1.0, 0.0
      %v305 = vsel %vm284, %v303, 0.0
      %306 = vadd.xlane.f32.xlu0 %v305
      %v307 = vpop.xlane.xlu0 %306
      %v308 = vsel %vm284, %v304, 0.0
      %309 = vadd.xlane.f32.xlu0 %v308
      %v310 = vpop.xlane.xlu0 %309
      %v311 = vadd.f32 %v307, 0.0
      %v312 = vadd.f32 %v310, 0.0
      %v313 = vrcp.pop %v311
      %v314 = vmul.f32 %v311, %v313
      %v315 = vsub.f32 1.0, %v314
      %v316 = vmul.f32 %v313, %v315
      %v317 = vadd.f32 %v313, %v316
      %vm318 = vweird.f32 %v311
      %vm319 = vweird.f32 %v313
      %vm320 = vmor %vm318, %vm319
      %v321 = vsel %vm320, %v313, %v317
      %v322 = vand.u32 2147483647, %v311
      %vm323 = vcmp.eq.f32.partialorder %v322, 8.507059e+37
      %v324 = vand.u32 %v311, 2147483648
      %v325 = vor.u32 1.1754944e-38, %v324
      %v326 = vsel %vm323, %v325, %v321
      %v327 = vmul.f32 %v301, %v326
      %v328 = vrcp.pop %v312
      %v329 = vmul.f32 %v312, %v328
      %v330 = vsub.f32 1.0, %v329
      %v331 = vmul.f32 %v328, %v330
      %v332 = vadd.f32 %v328, %v331
      %vm333 = vweird.f32 %v312
      %vm334 = vweird.f32 %v328
      %vm335 = vmor %vm333, %vm334
      %v336 = vsel %vm335, %v328, %v332
      %v337 = vand.u32 2147483647, %v312
      %vm338 = vcmp.eq.f32.partialorder %v337, 8.507059e+37
      %v339 = vand.u32 %v312, 2147483648
      %v340 = vor.u32 1.1754944e-38, %v339
      %v341 = vsel %vm338, %v340, %v336
      %v342 = vmul.f32 %v302, %v341
      %v343 = vlog2.pop %v291
      %v344 = vmul.f32 %v343, 0.6931472
      %v345 = vlog2.pop %v292
      %v346 = vmul.f32 %v345, 0.6931472
      %v347 = vsub.f32 %v327, %v344
      %v348 = vsub.f32 %v342, %v346
      %vm349 = vcmask 7168
      %v350 = vsel %vm349, %v347, 0.0
      %v351 = vsel %vm349, %v348, 0.0
      %v352 = vadd.f32 %v350, %v351
      %353 = vadd.xlane.f32.xlu0 %v352
      %v354 = vpop.xlane.xlu0 %353
      %v355 = vrot.slane %v354, 4
      %v356 = vadd.f32 %v354, %v355
      %v357 = vrot.slane %v356, 2
      %v358 = vadd.f32 %v356, %v357
      %v359 = vrot.slane %v358, 1
      %v360 = vadd.f32 %v358, %v359
      %s361 = vtos %v360
      %v362 = vrcp.pop 16.0
      %v363 = vmul.f32 16.0, %v362
      %v364 = vsub.f32 1.0, %v363
      %v365 = vmul.f32 %v362, %v364
      %v366 = vadd.f32 %v362, %v365
      %vm367 = vweird.f32 %v362
      %v368 = vsel %vm367, %v362, %v366
      %s369 = vtos %v368
      %s370 = smul.f32 %s361, %s369
      %s371 = smul.f32 %s370, -1.0
      %v372 = vstv %s371
      %373 = vst [vmem:[%s200] sm:$0x1] %v372
      %p374 = scmp.lt.s32.totalorder %s14, 2
      %s375 = scalar_select %p374, %s14, 2
      %s376 = scalar_lea.vmem %s3, %s375
      // Predicated region
      $region33: #{cond_supcon_loss.3} parent=31 // pred_check
        %p377 = pneg %p110
      $region34: #{cond_supcon_loss.3} parent=31 // pred_check_branch
        %379 = sbr.rel (%p377) target = $region36
      $region35: #{cond_supcon_loss.3} parent=31 // pred_region
        _
      $region36: #{cond_supcon_loss.3} parent=31 // pred_fallthru
        _
    $region32: #{cond_supcon_loss.3} parent=5 // pred_fallthru
      _
    %p380 = scmp.le.s32.totalorder 2, %s9
    // Predicated region
    $region37: #{cond_supcon_loss.3} parent=5 // pred_check
      %p381 = pneg %p380
    $region38: #{cond_supcon_loss.3} parent=5 // pred_check_branch
      %383 = sbr.rel (%p381) target = $region40
    $region39: #{cond_supcon_loss.3} parent=5 // pred_region
      %s384 = ssub.s32 %s9, 2
      // Predicated region
      $region41: #{cond_supcon_loss.3} parent=39 // pred_check
        %p385 = pneg %p116
      $region42: #{cond_supcon_loss.3} parent=39 // pred_check_branch
        %387 = sbr.rel (%p385) target = $region44
      $region43: #{cond_supcon_loss.3} parent=39 // pred_region
        %p388 = scmp.lt.s32.totalorder %s15, 2
        %s389 = scalar_select %p388, %s15, 2
        %s390 = scalar_lea.vmem %s3, %s389
      $region44: #{cond_supcon_loss.3} parent=39 // pred_fallthru
        _
    $region40: #{cond_supcon_loss.3} parent=5 // pred_fallthru
      _
  $region6: #{cond_supcon_loss.3} parent=0 // loop_footer
    %s13 = sadd.s32 1, %s9
  $region7: #{cond_supcon_loss.3} parent=0 // loop_footer_branch
    %8 = sbr.rel target = $region3
  $region8: #{cond_supcon_loss.3} parent=0 // loop_exit
    _

// kernel: cond_supcon_loss.2
$region0: #{cond_supcon_loss.2}
  #allocation0 [shape = 'u32[]', space=smem, size = 0x4, offset = 0x4, fixed_abs, tag = 'smem constant byte address 0x4 - core index']
  #allocation1 [shape = 'u32[72,128]{1,0:T(1,128)}', space=vmem, size = 0x9000, scoped, tag = 'internal scratch']
  #allocation2 [shape = 'f32[16,96]{1,0:T(8,128)}', space=vmem, size = 0x2000, scoped, tag = 'scratch operand']
  %s0 = inlined_call_operand.vmem [shape: bf16[16,1024], index: 0, kind: input, shape index: {}]
  %s1 = inlined_call_operand.vmem [shape: bf16[1024,96], index: 1, kind: input, shape index: {}]
  %s2 = inlined_call_operand.vmem [shape: f32[16,96], index: 2, kind: output, shape index: {}]
  %s3 = sld [smem:[#allocation0]]
  $region72: #{cond_supcon_loss.2} parent=0
    _
  %s5 = ssub.s32 1, %s3
  %s6 = scalar_select 0, %s5, %s3
  $region1: #{cond_supcon_loss.2} parent=0
    #allocation3 [shape = 'u8[32768]{0}', space=vmem, size = 0x8000, scoped, tag = 'input window, operand 0']
    loop: start=0, step=1, limit=4
    $region2: #{cond_supcon_loss.2} parent=1 // loop_pre_header
      _
    $region3: #{cond_supcon_loss.2} parent=1 // loop_header
      %s8 = sphi 0, %s12
      %p9 = scmp.ge.s32.totalorder %s8, 4
      %s15 = sphi 0, %s27
      %s16 = sphi 0, %s23
      %s17 = sphi 0, %s15
      %s18 = sphi 0, %s16
      %s19 = sphi 0, %s17
      %s20 = sphi 0, %s18
      %s32 = sphi 0, %s34
      %s35 = sphi 0, %s32
      %s36 = sphi 0, %s35
      %s52 = sphi 0, %s36
      %s58 = sphi 0, %s60
      %s61 = sphi 0, %s58
      %s62 = sphi 0, %s61
      %s78 = sphi 0, %s62
      %s84 = sphi 0, %s86
      %s87 = sphi 0, %s84
      %s88 = sphi 0, %s87
      %s104 = sphi 0, %s88
    $region4: #{cond_supcon_loss.2} parent=1 // loop_header_branch
      %11 = sbr.rel (%p9) target = $region8
    $region5: #{cond_supcon_loss.2} parent=1 // loop_body
      %s13 = ssub.s32 %s8, 1
      %s14 = ssub.s32 %s8, 2
      %s21 = sadd.s32 1, %s16
      %p22 = scmp.ge.s32.totalorder %s21, 2
      %s23 = scalar_select %p22, 0, %s21
      %s24 = sadd.s32 1, %s15
      %s25 = scalar_select %p22, %s24, %s15
      %p26 = scmp.ge.s32.totalorder %s25, 1
      %s27 = scalar_select %p26, 0, %s25
      %s28 = ssub.s32 %s15, %s27
      %s29 = ssub.s32 %s16, %s23
      %s30 = sor.u32 %s28, %s29
      %p31 = scmp.eq.s32.totalorder %s30, 0
      %s33 = sadd.s32 %s32, 1
      %s34 = scalar_select %p31, %s32, %s33
      %p37 = pneg %p31
      %p38 = scmp.eq.s32.totalorder %s8, 1
      %p39 = por %p37, %p38
      %p40 = scmp.ne.s32.totalorder %s32, %s35
      %p41 = scmp.eq.s32.totalorder %s8, 0
      %p42 = por %p40, %p41
      %p43 = scmp.ne.s32.totalorder %s32, %s35
      %p44 = scmp.eq.s32.totalorder %s13, 1
      %p45 = por %p43, %p44
      %p46 = scmp.ne.s32.totalorder %s35, %s36
      %p47 = scmp.eq.s32.totalorder %s13, 0
      %p48 = por %p46, %p47
      %p49 = scmp.ne.s32.totalorder %s35, %s36
      %p50 = scmp.eq.s32.totalorder %s14, 1
      %p51 = por %p49, %p50
      %p53 = scmp.ne.s32.totalorder %s36, %s52
      %p54 = scmp.eq.s32.totalorder %s14, 0
      %p55 = por %p53, %p54
      %s56 = ssub.s32 %s16, %s23
      %p57 = scmp.eq.s32.totalorder %s56, 0
      %s59 = sadd.s32 %s58, 1
      %s60 = scalar_select %p57, %s58, %s59
      %p63 = pneg %p57
      %p64 = scmp.eq.s32.totalorder %s8, 1
      %p65 = por %p63, %p64
      %p66 = scmp.ne.s32.totalorder %s58, %s61
      %p67 = scmp.eq.s32.totalorder %s8, 0
      %p68 = por %p66, %p67
      %p69 = scmp.ne.s32.totalorder %s58, %s61
      %p70 = scmp.eq.s32.totalorder %s13, 1
      %p71 = por %p69, %p70
      %p72 = scmp.ne.s32.totalorder %s61, %s62
      %p73 = scmp.eq.s32.totalorder %s13, 0
      %p74 = por %p72, %p73
      %p75 = scmp.ne.s32.totalorder %s61, %s62
      %p76 = scmp.eq.s32.totalorder %s14, 1
      %p77 = por %p75, %p76
      %p79 = scmp.ne.s32.totalorder %s62, %s78
      %p80 = scmp.eq.s32.totalorder %s14, 0
      %p81 = por %p79, %p80
      %s82 = ssub.s32 %s15, %s27
      %p83 = scmp.eq.s32.totalorder %s82, 0
      %s85 = sadd.s32 %s84, 1
      %s86 = scalar_select %p83, %s84, %s85
      %p89 = pneg %p83
      %p90 = scmp.eq.s32.totalorder %s8, 1
      %p91 = por %p89, %p90
      %p92 = scmp.ne.s32.totalorder %s84, %s87
      %p93 = scmp.eq.s32.totalorder %s8, 0
      %p94 = por %p92, %p93
      %p95 = scmp.ne.s32.totalorder %s84, %s87
      %p96 = scmp.eq.s32.totalorder %s13, 1
      %p97 = por %p95, %p96
      %p98 = scmp.ne.s32.totalorder %s87, %s88
      %p99 = scmp.eq.s32.totalorder %s13, 0
      %p100 = por %p98, %p99
      %p101 = scmp.ne.s32.totalorder %s87, %s88
      %p102 = scmp.eq.s32.totalorder %s14, 1
      %p103 = por %p101, %p102
      %p105 = scmp.ne.s32.totalorder %s88, %s104
      %p106 = scmp.eq.s32.totalorder %s14, 0
      %p107 = por %p105, %p106
      %p108 = scmp.le.s32.totalorder 1, %s8
      %p109 = scmp.lt.s32.totalorder %s8, 3
      %p110 = pnand %p108, %p109
      %p111 = pneg %p110
      // Predicated region
      $region9: #{cond_supcon_loss.2} parent=5 // pred_check
        _
      $region10: #{cond_supcon_loss.2} parent=5 // pred_check_branch
        %113 = sbr.rel (%p110) target = $region12
      $region11: #{cond_supcon_loss.2} parent=5 // pred_region
        %s114 = ssub.s32 %s8, 1
      $region12: #{cond_supcon_loss.2} parent=5 // pred_fallthru
        _
      %p115 = scmp.lt.s32.totalorder %s8, 2
      // Predicated region
      $region13: #{cond_supcon_loss.2} parent=5 // pred_check
        %p116 = pneg %p115
      $region14: #{cond_supcon_loss.2} parent=5 // pred_check_branch
        %118 = sbr.rel (%p116) target = $region16
      $region15: #{cond_supcon_loss.2} parent=5 // pred_region
        // Predicated region
        $region17: #{cond_supcon_loss.2} parent=15 // pred_check
          %p119 = pneg %p42
        $region18: #{cond_supcon_loss.2} parent=15 // pred_check_branch
          %121 = sbr.rel (%p119) target = $region20
        $region19: #{cond_supcon_loss.2} parent=15 // pred_region
          %s122 = sand.u32 %s32, 1
          %s123 = sand.u32 %s32, 1
          %s124 = smul.addr %s123, 32
          %s125 = scalar_lea.vmem [#allocation3], %s124
          %s126 = smul.u32 2, %s15
          %s127 = smul.u32 4, %s16
          %s128 = smul.addr %s126, 8
          %s129 = sadd.s32 %s127, %s128
          %s130 = smul.addr %s129, 4
          %s131 = scalar_lea.vmem %s0, %s130
          // Predicated region
          $region21: #{cond_supcon_loss.2} parent=19 // pred_check
            _
          $region22: #{cond_supcon_loss.2} parent=19 // pred_check_branch
            %133 = sbr.rel (0) target = $region24
          $region23: #{cond_supcon_loss.2} parent=19 // pred_region
            // Predicated region
            $region25: #{cond_supcon_loss.2} parent=23 // pred_check
              _
            $region26: #{cond_supcon_loss.2} parent=23 // pred_check_branch
              %135 = sbr.rel (0) target = $region28
            $region27: #{cond_supcon_loss.2} parent=23 // pred_region
              loop: start=0, step=1, limit=1
              $region29: #{cond_supcon_loss.2} parent=27 // loop_pre_header
                _
              $region30: #{cond_supcon_loss.2} parent=27 // loop_header
                %s137 = sphi 0, %s141
                %p138 = scmp.ge.s32.totalorder %s137, 1
                %s142 = sphi %s131, %s131
                %s143 = sphi %s125, %s125
              $region31: #{cond_supcon_loss.2} parent=27 // loop_header_branch
                %140 = sbr.rel (%p138) target = $region35
              $region32: #{cond_supcon_loss.2} parent=27 // loop_body
                %v144 = vld [vmem:[%s142] sm:$0xff]
                %145 = vst [vmem:[%s143] sm:$0xff] %v144
                %v146 = vld [vmem:[%s142 + $0x8] sm:$0xff]
                %147 = vst [vmem:[%s143 + $0x8] sm:$0xff] %v146
                %v148 = vld [vmem:[%s142 + $0x20] sm:$0xff]
                %149 = vst [vmem:[%s143 + $0x10] sm:$0xff] %v148
                %v150 = vld [vmem:[%s142 + $0x28] sm:$0xff]
                %151 = vst [vmem:[%s143 + $0x18] sm:$0xff] %v150
              $region33: #{cond_supcon_loss.2} parent=27 // loop_footer
                %s141 = sadd.s32 1, %s137
              $region34: #{cond_supcon_loss.2} parent=27 // loop_footer_branch
                %136 = sbr.rel target = $region30
              $region35: #{cond_supcon_loss.2} parent=27 // loop_exit
                _
            $region28: #{cond_supcon_loss.2} parent=23 // pred_fallthru
              _
            // Predicated region
            $region36: #{cond_supcon_loss.2} parent=23 // pred_check
              _
            $region37: #{cond_supcon_loss.2} parent=23 // pred_check_branch
              %153 = sbr.rel target = $region39
            $region38: #{cond_supcon_loss.2} parent=23 // pred_region
              _
            $region39: #{cond_supcon_loss.2} parent=23 // pred_fallthru
              _
          $region24: #{cond_supcon_loss.2} parent=19 // pred_fallthru
            _
          %154 = vnop
        $region20: #{cond_supcon_loss.2} parent=15 // pred_fallthru
          _
        // Predicated region
        $region40: #{cond_supcon_loss.2} parent=15 // pred_check
          %p155 = pneg %p68
        $region41: #{cond_supcon_loss.2} parent=15 // pred_check_branch
          %157 = sbr.rel (%p155) target = $region43
        $region42: #{cond_supcon_loss.2} parent=15 // pred_region
          %s158 = smul.u32 64, %s16
          %p159 = scmp.lt.s32.totalorder %s158, 127
          %s160 = scalar_select %p159, %s158, 127
          %s161 = smul.addr %s160, 4
          %s162 = scalar_lea.vmem %s1, %s161
          %s163 = smul.u32 64, %s16
        $region43: #{cond_supcon_loss.2} parent=15 // pred_fallthru
          _
      $region16: #{cond_supcon_loss.2} parent=5 // pred_fallthru
        _
      %p164 = scmp.le.s32.totalorder 1, %s8
      %p165 = scmp.lt.s32.totalorder %s8, 3
      %p166 = pnand %p164, %p165
      %p167 = pneg %p166
      // Predicated region
      $region44: #{cond_supcon_loss.2} parent=5 // pred_check
        _
      $region45: #{cond_supcon_loss.2} parent=5 // pred_check_branch
        %169 = sbr.rel (%p166) target = $region47
      $region46: #{cond_supcon_loss.2} parent=5 // pred_region
        %s170 = ssub.s32 %s8, 1
        %s171 = sand.u32 %s35, 1
        %s172 = sand.u32 %s35, 1
        %s173 = smul.addr %s172, 32
        %s174 = scalar_lea.vmem [#allocation3], %s173
        // Predicated region
        $region48: #{cond_supcon_loss.2} parent=46 // pred_check
          %p175 = pneg %p48
        $region49: #{cond_supcon_loss.2} parent=46 // pred_check_branch
          %177 = sbr.rel (%p175) target = $region51
        $region50: #{cond_supcon_loss.2} parent=46 // pred_region
          _
        $region51: #{cond_supcon_loss.2} parent=46 // pred_fallthru
          _
        %s178 = sand.u32 %s35, 1
        %s179 = sand.u32 %s35, 1
        %s180 = smul.addr %s179, 32
        %s181 = scalar_lea.vmem [#allocation3], %s180
        %p182 = pneg %p48
        %p183 = pneg %p45
        %s184 = smul.u32 64, %s18
        %p185 = scmp.lt.s32.totalorder %s184, 127
        %s186 = scalar_select %p185, %s184, 127
        %s187 = smul.addr %s186, 4
        %s188 = scalar_lea.vmem %s1, %s187
        %p189 = pneg %p74
        %p190 = pneg %p71
        %p191 = pneg %p100
        %p192 = pneg %p97
        %s193 = smul.u32 2, %s17
        %p194 = scmp.lt.s32.totalorder %s193, 1
        %s195 = scalar_select %p194, %s193, 1
        %s196 = smul.addr %s195, 8
        %s197 = scalar_lea.vmem %s2, %s196
        %s198 = smul.u32 2, %s17
        %s199 = smul.u32 4, %s18
        %s200 = smul.u32 64, %s18
        %p201 = scmp.lt.s32.totalorder %s200, 127
        %s202 = scalar_select %p201, %s200, 127
        %s203 = smul.addr %s202, 4
        %s204 = scalar_lea.vmem %s1, %s203
        %s205 = smul.u32 64, %s18
        %s206 = smul.u32 2, %s17
        %p207 = scmp.lt.s32.totalorder %s206, 1
        %s208 = scalar_select %p207, %s206, 1
        %s209 = smul.addr %s208, 8
        %s210 = scalar_lea.vmem %s2, %s209
        %s211 = smul.u32 2, %s17
        %p212 = scmp.eq.s32.totalorder %s18, 0
        // Predicated region
        $region52: #{cond_supcon_loss.2} parent=46 // pred_check
          %p213 = pneg %p212
        $region53: #{cond_supcon_loss.2} parent=46 // pred_check_branch
          %215 = sbr.rel (%p213) target = $region55
        $region54: #{cond_supcon_loss.2} parent=46 // pred_region
          %vm216 = vcmask 785408
          %217 = vst.msk [vmem:[#allocation2] sm:$0xff] %vm216, 0.0
          %218 = vst.msk [vmem:[#allocation2 + $0x8] sm:$0xff] %vm216, 0.0
        $region55: #{cond_supcon_loss.2} parent=46 // pred_fallthru
          _
        %v219 = vld [vmem:[#allocation2] sm:$0xff]
        %v220 = vld [vmem:[#allocation2 + $0x8] sm:$0xff]
        %v221 = vld [vmem:[%s174] sm:$0xff]
        %v222 = vld [vmem:[%s174 + $0x8] sm:$0xff]
        %v223 = vld [vmem:[%s174 + $0x10] sm:$0xff]
        %v224 = vld [vmem:[%s174 + $0x18] sm:$0xff]
        %v225 = vld [vmem:[%s204] sm:$0xf]
        %v226 = vld [vmem:[%s204 + $0x4] sm:$0xf]
        %v227 = vld [vmem:[%s204 + $0x8] sm:$0xf]
        %v228 = vld [vmem:[%s204 + $0xc] sm:$0xf]
        %v229 = vld [vmem:[%s204 + $0x10] sm:$0xf]
        %v230 = vld [vmem:[%s204 + $0x14] sm:$0xf]
        %v231 = vld [vmem:[%s204 + $0x18] sm:$0xf]
        %v232 = vld [vmem:[%s204 + $0x1c] sm:$0xf]
        %v233 = vld [vmem:[%s204 + $0x20] sm:$0xf]
        %v234 = vld [vmem:[%s204 + $0x24] sm:$0xf]
        %v235 = vld [vmem:[%s204 + $0x28] sm:$0xf]
        %v236 = vld [vmem:[%s204 + $0x2c] sm:$0xf]
        %v237 = vld [vmem:[%s204 + $0x30] sm:$0xf]
        %v238 = vld [vmem:[%s204 + $0x34] sm:$0xf]
        %v239 = vld [vmem:[%s204 + $0x38] sm:$0xf]
        %v240 = vld [vmem:[%s204 + $0x3c] sm:$0xf]
        %v241 = vld [vmem:[%s204 + $0x40] sm:$0xf]
        %v242 = vld [vmem:[%s204 + $0x44] sm:$0xf]
        %v243 = vld [vmem:[%s204 + $0x48] sm:$0xf]
        %v244 = vld [vmem:[%s204 + $0x4c] sm:$0xf]
        %v245 = vld [vmem:[%s204 + $0x50] sm:$0xf]
        %v246 = vld [vmem:[%s204 + $0x54] sm:$0xf]
        %v247 = vld [vmem:[%s204 + $0x58] sm:$0xf]
        %v248 = vld [vmem:[%s204 + $0x5c] sm:$0xf]
        %v249 = vld [vmem:[%s204 + $0x60] sm:$0xf]
        %v250 = vld [vmem:[%s204 + $0x64] sm:$0xf]
        %v251 = vld [vmem:[%s204 + $0x68] sm:$0xf]
        %v252 = vld [vmem:[%s204 + $0x6c] sm:$0xf]
        %v253 = vld [vmem:[%s204 + $0x70] sm:$0xf]
        %v254 = vld [vmem:[%s204 + $0x74] sm:$0xf]
        %v255 = vld [vmem:[%s204 + $0x78] sm:$0xf]
        %v256 = vld [vmem:[%s204 + $0x7c] sm:$0xf]
        %v257 = vld [vmem:[%s204 + $0x80] sm:$0xf]
        %v258 = vld [vmem:[%s204 + $0x84] sm:$0xf]
        %v259 = vld [vmem:[%s204 + $0x88] sm:$0xf]
        %v260 = vld [vmem:[%s204 + $0x8c] sm:$0xf]
        %v261 = vld [vmem:[%s204 + $0x90] sm:$0xf]
        %v262 = vld [vmem:[%s204 + $0x94] sm:$0xf]
        %v263 = vld [vmem:[%s204 + $0x98] sm:$0xf]
        %v264 = vld [vmem:[%s204 + $0x9c] sm:$0xf]
        %v265 = vld [vmem:[%s204 + $0xa0] sm:$0xf]
        %v266 = vld [vmem:[%s204 + $0xa4] sm:$0xf]
        %v267 = vld [vmem:[%s204 + $0xa8] sm:$0xf]
        %v268 = vld [vmem:[%s204 + $0xac] sm:$0xf]
        %v269 = vld [vmem:[%s204 + $0xb0] sm:$0xf]
        %v270 = vld [vmem:[%s204 + $0xb4] sm:$0xf]
        %v271 = vld [vmem:[%s204 + $0xb8] sm:$0xf]
        %v272 = vld [vmem:[%s204 + $0xbc] sm:$0xf]
        %v273 = vld [vmem:[%s204 + $0xc0] sm:$0xf]
        %v274 = vld [vmem:[%s204 + $0xc4] sm:$0xf]
        %v275 = vld [vmem:[%s204 + $0xc8] sm:$0xf]
        %v276 = vld [vmem:[%s204 + $0xcc] sm:$0xf]
        %v277 = vld [vmem:[%s204 + $0xd0] sm:$0xf]
        %v278 = vld [vmem:[%s204 + $0xd4] sm:$0xf]
        %v279 = vld [vmem:[%s204 + $0xd8] sm:$0xf]
        %v280 = vld [vmem:[%s204 + $0xdc] sm:$0xf]
        %v281 = vld [vmem:[%s204 + $0xe0] sm:$0xf]
        %v282 = vld [vmem:[%s204 + $0xe4] sm:$0xf]
        %v283 = vld [vmem:[%s204 + $0xe8] sm:$0xf]
        %v284 = vld [vmem:[%s204 + $0xec] sm:$0xf]
        %v285 = vld [vmem:[%s204 + $0xf0] sm:$0xf]
        %v286 = vld [vmem:[%s204 + $0xf4] sm:$0xf]
        %v287 = vld [vmem:[%s204 + $0xf8] sm:$0xf]
        %v288 = vld [vmem:[%s204 + $0xfc] sm:$0xf]
        %v293 = vunpack.c.l.b16 %v221
        %v294 = vunpack.c.h.b16 %v221
        %v295 = vunpack.c.l.b16 %v222
        %v296 = vunpack.c.h.b16 %v222
        %v297 = vunpack.c.l.b16 %v223
        %v298 = vunpack.c.h.b16 %v223
        %v299 = vunpack.c.l.b16 %v224
        %v300 = vunpack.c.h.b16 %v224
        %v301 = vpack.c.b16 %v297, %v293
        %v302 = vpack.c.b16 %v298, %v294
        %v303 = vpack.c.b16 %v299, %v295
        %v304 = vpack.c.b16 %v300, %v296
        %v373 = vunpack.c.l.b16 %v225
        %v374 = vunpack.c.l.b16 %v226
        %v375 = vunpack.c.l.b16 %v227
        %v376 = vunpack.c.l.b16 %v228
        %v377 = vunpack.c.l.b16 %v229
        %v378 = vunpack.c.l.b16 %v230
        %v379 = vunpack.c.l.b16 %v231
        %v380 = vunpack.c.l.b16 %v232
        %v381 = vunpack.c.l.b16 %v233
        %v382 = vunpack.c.l.b16 %v234
        %v383 = vunpack.c.l.b16 %v235
        %v384 = vunpack.c.l.b16 %v236
        %v385 = vunpack.c.l.b16 %v237
        %v386 = vunpack.c.l.b16 %v238
        %v387 = vunpack.c.l.b16 %v239
        %v388 = vunpack.c.l.b16 %v240
        %v389 = vunpack.c.l.b16 %v241
        %v390 = vunpack.c.l.b16 %v242
        %v391 = vunpack.c.l.b16 %v243
        %v392 = vunpack.c.l.b16 %v244
        %v393 = vunpack.c.l.b16 %v245
        %v394 = vunpack.c.l.b16 %v246
        %v395 = vunpack.c.l.b16 %v247
        %v396 = vunpack.c.l.b16 %v248
        %v397 = vunpack.c.l.b16 %v249
        %v398 = vunpack.c.l.b16 %v250
        %v399 = vunpack.c.l.b16 %v251
        %v400 = vunpack.c.l.b16 %v252
        %v401 = vunpack.c.l.b16 %v253
        %v402 = vunpack.c.l.b16 %v254
        %v403 = vunpack.c.l.b16 %v255
        %v404 = vunpack.c.l.b16 %v256
        %v405 = vunpack.c.l.b16 %v257
        %v406 = vunpack.c.l.b16 %v258
        %v407 = vunpack.c.l.b16 %v259
        %v408 = vunpack.c.l.b16 %v260
        %v409 = vunpack.c.l.b16 %v261
        %v410 = vunpack.c.l.b16 %v262
        %v411 = vunpack.c.l.b16 %v263
        %v412 = vunpack.c.l.b16 %v264
        %v413 = vunpack.c.l.b16 %v265
        %v414 = vunpack.c.l.b16 %v266
        %v415 = vunpack.c.l.b16 %v267
        %v416 = vunpack.c.l.b16 %v268
        %v417 = vunpack.c.l.b16 %v269
        %v418 = vunpack.c.l.b16 %v270
        %v419 = vunpack.c.l.b16 %v271
        %v420 = vunpack.c.l.b16 %v272
        %v421 = vunpack.c.l.b16 %v273
        %v422 = vunpack.c.l.b16 %v274
        %v423 = vunpack.c.l.b16 %v275
        %v424 = vunpack.c.l.b16 %v276
        %v425 = vunpack.c.l.b16 %v277
        %v426 = vunpack.c.l.b16 %v278
        %v427 = vunpack.c.l.b16 %v279
        %v428 = vunpack.c.l.b16 %v280
        %v429 = vunpack.c.l.b16 %v281
        %v430 = vunpack.c.l.b16 %v282
        %v431 = vunpack.c.l.b16 %v283
        %v432 = vunpack.c.l.b16 %v284
        %v433 = vunpack.c.l.b16 %v285
        %v434 = vunpack.c.l.b16 %v286
        %v435 = vunpack.c.l.b16 %v287
        %v436 = vunpack.c.l.b16 %v288
        %v437 = vpack.c.b16 %v374, %v373
        %v438 = vpack.c.b16 %v376, %v375
        %v439 = vpack.c.b16 %v378, %v377
        %v440 = vpack.c.b16 %v380, %v379
        %v441 = vpack.c.b16 %v382, %v381
        %v442 = vpack.c.b16 %v384, %v383
        %v443 = vpack.c.b16 %v386, %v385
        %v444 = vpack.c.b16 %v388, %v387
        %v445 = vpack.c.b16 %v390, %v389
        %v446 = vpack.c.b16 %v392, %v391
        %v447 = vpack.c.b16 %v394, %v393
        %v448 = vpack.c.b16 %v396, %v395
        %v449 = vpack.c.b16 %v398, %v397
        %v450 = vpack.c.b16 %v400, %v399
        %v451 = vpack.c.b16 %v402, %v401
        %v452 = vpack.c.b16 %v404, %v403
        %v453 = vpack.c.b16 %v406, %v405
        %v454 = vpack.c.b16 %v408, %v407
        %v455 = vpack.c.b16 %v410, %v409
        %v456 = vpack.c.b16 %v412, %v411
        %v457 = vpack.c.b16 %v414, %v413
        %v458 = vpack.c.b16 %v416, %v415
        %v459 = vpack.c.b16 %v418, %v417
        %v460 = vpack.c.b16 %v420, %v419
        %v461 = vpack.c.b16 %v422, %v421
        %v462 = vpack.c.b16 %v424, %v423
        %v463 = vpack.c.b16 %v426, %v425
        %v464 = vpack.c.b16 %v428, %v427
        %v465 = vpack.c.b16 %v430, %v429
        %v466 = vpack.c.b16 %v432, %v431
        %v467 = vpack.c.b16 %v434, %v433
        %v468 = vpack.c.b16 %v436, %v435
        %501 = vmatpush.bf16.msra.mxu0 %v444
        %502 = vmatpush.bf16.msra.mxu0 %v443
        %503 = vmatpush.bf16.msra.mxu0 %v442
        %504 = vmatpush.bf16.msra.mxu0 %v441
        %505 = vmatpush.bf16.msra.mxu0 %v440
        %506 = vmatpush.bf16.msra.mxu0 %v439
        %507 = vmatpush.bf16.msra.mxu0 %v438
        %508 = vmatpush.bf16.msra.mxu0 %v437
        %509 = vmatmul.bf16.gmra.mxu0 %v301
        %v510 = vpop.f32.mrf.mxu0
        %v511 = vadd.f32 0.0, %v510
        %v512 = vpop.f32.mrf.mxu0
        %v513 = vadd.f32 0.0, %v512
        %514 = vdwg.mxu0
        %515 = vmatpush.bf16.msra.mxu0 %v452
        %516 = vmatpush.bf16.msra.mxu0 %v451
        %517 = vmatpush.bf16.msra.mxu0 %v450
        %518 = vmatpush.bf16.msra.mxu0 %v449
        %519 = vmatpush.bf16.msra.mxu0 %v448
        %520 = vmatpush.bf16.msra.mxu0 %v447
        %521 = vmatpush.bf16.msra.mxu0 %v446
        %522 = vmatpush.bf16.msra.mxu0 %v445
        %523 = vmatmul.bf16.gmra.mxu0 %v302
        %v524 = vpop.f32.mrf.mxu0
        %v525 = vadd.f32 %v511, %v524
        %v526 = vpop.f32.mrf.mxu0
        %v527 = vadd.f32 %v513, %v526
        %528 = vdwg.mxu0
        %529 = vmatpush.bf16.msra.mxu0 %v460
        %530 = vmatpush.bf16.msra.mxu0 %v459
        %531 = vmatpush.bf16.msra.mxu0 %v458
        %532 = vmatpush.bf16.msra.mxu0 %v457
        %533 = vmatpush.bf16.msra.mxu0 %v456
        %534 = vmatpush.bf16.msra.mxu0 %v455
        %535 = vmatpush.bf16.msra.mxu0 %v454
        %536 = vmatpush.bf16.msra.mxu0 %v453
        %537 = vmatmul.bf16.gmra.mxu0 %v303
        %v538 = vpop.f32.mrf.mxu0
        %v539 = vadd.f32 %v525, %v538
        %v540 = vpop.f32.mrf.mxu0
        %v541 = vadd.f32 %v527, %v540
        %542 = vdwg.mxu0
        %543 = vmatpush.bf16.msra.mxu0 %v468
        %544 = vmatpush.bf16.msra.mxu0 %v467
        %545 = vmatpush.bf16.msra.mxu0 %v466
        %546 = vmatpush.bf16.msra.mxu0 %v465
        %547 = vmatpush.bf16.msra.mxu0 %v464
        %548 = vmatpush.bf16.msra.mxu0 %v463
        %549 = vmatpush.bf16.msra.mxu0 %v462
        %550 = vmatpush.bf16.msra.mxu0 %v461
        %551 = vmatmul.bf16.gmra.mxu0 %v304
        %v552 = vpop.f32.mrf.mxu0
        %v553 = vadd.f32 %v539, %v552
        %v554 = vpop.f32.mrf.mxu0
        %v555 = vadd.f32 %v541, %v554
        %556 = vdwg.mxu0
        %v557 = vadd.f32 %v219, %v553
        %v558 = vadd.f32 %v220, %v555
        %vm559 = vcmask 785408
        %560 = vst.msk [vmem:[#allocation2] sm:$0xff] %vm559, %v557
        %561 = vst.msk [vmem:[#allocation2 + $0x8] sm:$0xff] %vm559, %v558
        %p562 = scmp.eq.s32.totalorder %s18, 1
        // Predicated region
        $region56: #{cond_supcon_loss.2} parent=46 // pred_check
          %p563 = pneg %p562
        $region57: #{cond_supcon_loss.2} parent=46 // pred_check_branch
          %565 = sbr.rel (%p563) target = $region59
        $region58: #{cond_supcon_loss.2} parent=46 // pred_region
          %v566 = vld [vmem:[#allocation2] sm:$0xff]
          %v567 = vld [vmem:[#allocation2 + $0x8] sm:$0xff]
          %568 = vst.msk [vmem:[%s210] sm:$0xff] %vm559, %v566
          %569 = vst.msk [vmem:[%s210 + $0x8] sm:$0xff] %vm559, %v567
        $region59: #{cond_supcon_loss.2} parent=46 // pred_fallthru
          _
        %s570 = smul.u32 2, %s17
        %p571 = scmp.lt.s32.totalorder %s570, 1
        %s572 = scalar_select %p571, %s570, 1
        %s573 = smul.addr %s572, 8
        %s574 = scalar_lea.vmem %s2, %s573
        // Predicated region
        $region60: #{cond_supcon_loss.2} parent=46 // pred_check
          %p575 = pneg %p97
        $region61: #{cond_supcon_loss.2} parent=46 // pred_check_branch
          %577 = sbr.rel (%p575) target = $region63
        $region62: #{cond_supcon_loss.2} parent=46 // pred_region
          %s578 = smul.u32 2, %s17
        $region63: #{cond_supcon_loss.2} parent=46 // pred_fallthru
          _
        // Predicated region
        $region64: #{cond_supcon_loss.2} parent=46 // pred_check
          %p579 = pneg %p97
        $region65: #{cond_supcon_loss.2} parent=46 // pred_check_branch
          %581 = sbr.rel (%p579) target = $region67
        $region66: #{cond_supcon_loss.2} parent=46 // pred_region
          %s582 = smul.u32 2, %s17
          %p583 = scmp.lt.s32.totalorder %s582, 1
          %s584 = scalar_select %p583, %s582, 1
          %s585 = smul.addr %s584, 8
          %s586 = scalar_lea.vmem %s2, %s585
        $region67: #{cond_supcon_loss.2} parent=46 // pred_fallthru
          _
      $region47: #{cond_supcon_loss.2} parent=5 // pred_fallthru
        _
      %p587 = scmp.le.s32.totalorder 2, %s8
      // Predicated region
      $region68: #{cond_supcon_loss.2} parent=5 // pred_check
        %p588 = pneg %p587
      $region69: #{cond_supcon_loss.2} parent=5 // pred_check_branch
        %590 = sbr.rel (%p588) target = $region71
      $region70: #{cond_supcon_loss.2} parent=5 // pred_region
        %s591 = ssub.s32 %s8, 2
      $region71: #{cond_supcon_loss.2} parent=5 // pred_fallthru
        _
    $region6: #{cond_supcon_loss.2} parent=1 // loop_footer
      %s12 = sadd.s32 1, %s8
    $region7: #{cond_supcon_loss.2} parent=1 // loop_footer_branch
      %7 = sbr.rel target = $region3
    $region8: #{cond_supcon_loss.2} parent=1 // loop_exit
      _

</llo_original>
